<compile_context>
chip_gen: v6e
topology: v6e:2x2x1
jax: 0.10.0
libtpu: 0.0.40
codegen_flags: <defaults>
</compile_context>

<pallas_src>
from itertools import permutations

import numpy as np
import jax
import jax.numpy as jnp
from jax.experimental import pallas as pl
from jax.experimental.pallas import tpu as pltpu


# ----------------------------------------------------------------------------
# Host-side init: reproduce scipy.stats.weightedtau (default args: rank=True,
# hyperbolic additive weigher w(r) = 1/(r+1)) for tie-free inputs.  Only used
# to build the constant tables, exactly as the PyTorch __init__ does.
# ----------------------------------------------------------------------------
def _weightedtau_no_ties(x, y):
    x = np.asarray(x, dtype=np.float64)
    y = np.asarray(y, dtype=np.float64)
    n = x.shape[0]

    def one_way(a, b):
        # rank by decreasing lexicographic order on (a, b): best element -> rank 0
        perm = np.lexsort((b, a))[::-1]
        rank = np.empty(n, dtype=np.intp)
        rank[perm] = np.arange(n)
        w = 1.0 / (rank + 1.0)
        num = 0.0
        tot = 0.0
        for i in range(n):
            for j in range(i + 1, n):
                wij = w[i] + w[j]
                tot += wij
                num += wij * np.sign(a[i] - a[j]) * np.sign(b[i] - b[j])
        return num / tot

    return 0.5 * (one_way(x, y) + one_way(y, x))


def build_tau_tables(num_rnk, use_tau):
    """Returns (tau_weight (P,P) f32, tau_entropy (P,) f32) where
    tau_entropy[c] = sum_j xlogy(tau[c,j], tau[c,j])."""
    perms = np.array(list(permutations(range(num_rnk), num_rnk)))
    tot = np.array(
        [[_weightedtau_no_ties(2 - pi, 2 - pj) for pj in perms] for pi in perms],
        dtype=np.float64,
    )
    if not use_tau:
        tot = (tot + 1.0) / 2.0
    with np.errstate(divide="ignore", invalid="ignore"):
        xlogx = np.where(tot == 0.0, 0.0, tot * np.log(tot))
    tau_entropy = xlogx.sum(axis=1)
    return (jnp.asarray(tot, dtype=jnp.float32),
            jnp.asarray(tau_entropy, dtype=jnp.float32))


# ----------------------------------------------------------------------------
# Pallas kernel: per batch-tile partial sum of
#   KLDivLoss(log_softmax(x), tau_weight[target], reduction='sum')
# + sum_i( -log_softmax(x)[i, target_i] )
# (the /B of 'batchmean' and CE 'mean' is applied once in the wrapper).
# ----------------------------------------------------------------------------
def _ce_wbt_kernel(logits_ref, tgt_idx_ref, tau_ref, h_ref, out_ref):
    x = logits_ref[...].astype(jnp.float32)        # (tb, P) logits (native dtype in HBM)
    tb, p = x.shape

    # log_softmax along the last (lane) dim
    m = jnp.max(x, axis=-1, keepdims=True)
    z = x - m
    lse = jnp.log(jnp.sum(jnp.exp(z), axis=-1, keepdims=True))
    logp = z - lse                                  # (tb, P)

    # One-hot of target.  Padded / out-of-range targets (-1) give an all-zero
    # row, which contributes exactly 0 to every term below.
    col = jax.lax.broadcasted_iota(jnp.int32, (tb, p), 1)
    onehot = (col == tgt_idx_ref[...]).astype(jnp.float32)      # (tb, P)

    # t = tau_weight[target] via one-hot @ tau on the MXU (no (B,P) gather input).
    t = jnp.dot(onehot, tau_ref[...], preferred_element_type=jnp.float32)

    # Fused KL + CE partial sum:
    #   sum_i h[target_i]  -  sum_ij (t_ij + onehot_ij) * logp_ij
    partial = jnp.sum(onehot * h_ref[...]) - jnp.sum((t + onehot) * logp)
    out_ref[0, 0] = partial


def ce_wbt_loss(logits, target, tau_weight, tau_entropy, *, tile_b=512):
    """CE_WBT.forward(input, target). logits: (B, P), target: (B,) int."""
    B, P = logits.shape

    # Batch tile: multiple of 8 sublanes, capped at tile_b; pad B if needed.
    tb = min(tile_b, B)
    tb = max(8, ((tb + 7) // 8) * 8)
    B_pad = ((B + tb - 1) // tb) * tb
    num_tiles = B_pad // tb

    tgt = target.astype(jnp.int32)
    if B_pad != B:
        logits = jnp.pad(logits, ((0, B_pad - B), (0, 0)))
        # Padded rows get target=-1 -> all-zero one-hot -> contribute 0.
        tgt = jnp.pad(tgt, (0, B_pad - B), constant_values=-1)
    tgt_idx = tgt.reshape(B_pad, 1)
    h = tau_entropy.reshape(1, P)

    partials = pl.pallas_call(
        _ce_wbt_kernel,
        out_shape=jax.ShapeDtypeStruct((num_tiles, 1), jnp.float32),
        grid=(num_tiles,),
        in_specs=[
            pl.BlockSpec((tb, P), lambda i: (i, 0)),   # logits tile
            pl.BlockSpec((tb, 1), lambda i: (i, 0)),   # targets tile
            pl.BlockSpec((P, P), lambda i: (0, 0)),    # tau table (resident)
            pl.BlockSpec((1, P), lambda i: (0, 0)),    # per-class entropy (resident)
        ],
        out_specs=pl.BlockSpec((1, 1), lambda i: (i, 0),
                               memory_space=pltpu.MemorySpace.SMEM),
        compiler_params=pltpu.CompilerParams(
            dimension_semantics=("parallel",)),        # independent tiles (v7x 2 TCs)
    )(logits, tgt_idx, tau_weight, h)

    # KLDiv 'batchmean' and CE 'mean' both divide by the true batch size.
    return jnp.sum(partials) / B


if __name__ == "__main__":
    num_rnk = 3
    use_tau = False      # use_tau=True yields negative "probabilities" -> NaN in
                         # PyTorch's KLDiv too; use_tau=False keeps values in [0,1]
    B = 8

    tau_weight, tau_entropy = build_tau_tables(num_rnk, use_tau)   # (P,P), (P,)
    P = tau_weight.shape[0]                                        # 3! = 6

    key = jax.random.PRNGKey(0)
    k1, k2 = jax.random.split(key)
    logits = jax.random.normal(k1, (B, P), dtype=jnp.float32)
    target = jax.random.randint(k2, (B,), 0, P, dtype=jnp.int32)

    loss = jax.block_until_ready(ce_wbt_loss(logits, target, tau_weight, tau_entropy))

    # Plain-JAX reference (same semantics as the PyTorch module).
    logp = jax.nn.log_softmax(logits, axis=-1)
    t = tau_weight[target]
    kl_ref = jnp.sum(jnp.where(t == 0.0, 0.0, t * jnp.log(t)) - t * logp) / B
    ce_ref = -jnp.mean(logp[jnp.arange(B), target])
    ref = kl_ref + ce_ref

    assert np.allclose(np.asarray(loss), np.asarray(ref), rtol=1e-5, atol=1e-5), (
        float(loss), float(ref))
    print("KERNEL_OK")
</pallas_src>

<mosaic_0001>
module attributes {stable_mosaic.version = 11 : i64} {
  func.func @_ce_wbt_kernel(%arg0: i32, %arg1: memref<8x6xf32, #tpu.memory_space<vmem>>, %arg2: memref<8x1xi32, #tpu.memory_space<vmem>>, %arg3: memref<6x6xf32, #tpu.memory_space<vmem>>, %arg4: memref<1x6xf32, #tpu.memory_space<vmem>>, %arg5: memref<1x1xf32, #tpu.memory_space<smem>>) attributes {dimension_semantics = [#tpu.dimension_semantics<parallel>], iteration_bounds = array<i64: 1>, scalar_prefetch = 0 : i64, scratch_operands = 0 : i64, tpu.core_type = #tpu.core_type<tc>, window_params = [{transform_indices = @transform_0, window_bounds = array<i64: 8, 6>}, {transform_indices = @transform_1, window_bounds = array<i64: 8, 1>}, {pipeline_mode = #tpu.pipeline_mode<synchronous>, transform_indices = @transform_2, window_bounds = array<i64: 6, 6>}, {pipeline_mode = #tpu.pipeline_mode<synchronous>, transform_indices = @transform_3, window_bounds = array<i64: 1, 6>}, {transform_indices = @transform_4, window_bounds = array<i64: 1, 1>}]} {
    %c0 = arith.constant 0 : index
    %c0_0 = arith.constant 0 : index
    %0 = vector.load %arg1[%c0, %c0_0] : memref<8x6xf32, #tpu.memory_space<vmem>>, vector<8x6xf32>
    %cst = arith.constant dense<0xFF800000> : vector<8xf32>
    %1 = vector.multi_reduction <maximumf>, %0, %cst [1] : vector<8x6xf32> to vector<8xf32>
    %2 = vector.shape_cast %1 : vector<8xf32> to vector<8x1xf32>
    %3 = vector.broadcast %2 : vector<8x1xf32> to vector<8x6xf32>
    %4 = arith.subf %0, %3 : vector<8x6xf32>
    %5 = math.exp %4 : vector<8x6xf32>
    %cst_1 = arith.constant dense<0.000000e+00> : vector<8xf32>
    %6 = vector.multi_reduction <add>, %5, %cst_1 [1] : vector<8x6xf32> to vector<8xf32>
    %7 = vector.shape_cast %6 : vector<8xf32> to vector<8x1xf32>
    %8 = math.log %7 : vector<8x1xf32>
    %9 = vector.broadcast %8 : vector<8x1xf32> to vector<8x6xf32>
    %10 = arith.subf %4, %9 : vector<8x6xf32>
    %11 = tpu.iota {dimensions = array<i32: 1>} : vector<8x6xi32>
    %c0_2 = arith.constant 0 : index
    %c0_3 = arith.constant 0 : index
    %12 = vector.load %arg2[%c0_2, %c0_3] : memref<8x1xi32, #tpu.memory_space<vmem>>, vector<8x1xi32>
    %13 = vector.broadcast %12 : vector<8x1xi32> to vector<8x6xi32>
    %14 = arith.cmpi eq, %11, %13 : vector<8x6xi32>
    %15 = arith.extui %14 : vector<8x6xi1> to vector<8x6xi32>
    %16 = arith.sitofp %15 : vector<8x6xi32> to vector<8x6xf32>
    %c0_4 = arith.constant 0 : index
    %c0_5 = arith.constant 0 : index
    %17 = vector.load %arg3[%c0_4, %c0_5] : memref<6x6xf32, #tpu.memory_space<vmem>>, vector<6x6xf32>
    %cst_6 = arith.constant dense<0.000000e+00> : vector<8x6xf32>
    %18 = tpu.matmul %16, %17, %cst_6 {dimension_numbers = #tpu.dot_dimension_numbers<[1], [0], [0], [1], [0, 0, 1, 1], [], []>} : vector<8x6xf32>, vector<6x6xf32>, vector<8x6xf32> -> vector<8x6xf32>
    %c0_7 = arith.constant 0 : index
    %c0_8 = arith.constant 0 : index
    %19 = vector.load %arg4[%c0_7, %c0_8] : memref<1x6xf32, #tpu.memory_space<vmem>>, vector<1x6xf32>
    %20 = vector.broadcast %19 : vector<1x6xf32> to vector<8x6xf32>
    %21 = arith.mulf %16, %20 : vector<8x6xf32>
    %22 = vector.shape_cast %21 : vector<8x6xf32> to vector<1x8x6xf32>
    %cst_9 = arith.constant dense<0.000000e+00> : vector<1xf32>
    %23 = vector.multi_reduction <add>, %22, %cst_9 [1, 2] : vector<1x8x6xf32> to vector<1xf32>
    %24 = vector.shape_cast %23 : vector<1xf32> to vector<1x1x1xf32>
    %25 = vector.extract %24[0, 0, 0] : f32 from vector<1x1x1xf32>
    %26 = arith.addf %18, %16 : vector<8x6xf32>
    %27 = arith.mulf %26, %10 : vector<8x6xf32>
    %28 = vector.shape_cast %27 : vector<8x6xf32> to vector<1x8x6xf32>
    %cst_10 = arith.constant dense<0.000000e+00> : vector<1xf32>
    %29 = vector.multi_reduction <add>, %28, %cst_10 [1, 2] : vector<1x8x6xf32> to vector<1xf32>
    %30 = vector.shape_cast %29 : vector<1xf32> to vector<1x1x1xf32>
    %31 = vector.extract %30[0, 0, 0] : f32 from vector<1x1x1xf32>
    %32 = arith.subf %25, %31 : f32
    %c0_11 = arith.constant 0 : index
    %c0_12 = arith.constant 0 : index
    %33 = memref.load %arg5[%c0_11, %c0_12] : memref<1x1xf32, #tpu.memory_space<smem>>
    memref.store %32, %arg5[%c0_11, %c0_12] : memref<1x1xf32, #tpu.memory_space<smem>>
    return
  }
  func.func @transform_0(%arg0: i32) -> (i32, i32) {
    %c0_i32 = arith.constant 0 : i32
    %c0_i32_0 = arith.constant 0 : i32
    return %arg0, %c0_i32 : i32, i32
  }
  func.func @transform_1(%arg0: i32) -> (i32, i32) {
    %c0_i32 = arith.constant 0 : i32
    %c0_i32_0 = arith.constant 0 : i32
    return %arg0, %c0_i32 : i32, i32
  }
  func.func @transform_2(%arg0: i32) -> (i32, i32) {
    %c0_i32 = arith.constant 0 : i32
    %c0_i32_0 = arith.constant 0 : i32
    %c0_i32_1 = arith.constant 0 : i32
    return %c0_i32, %c0_i32_0 : i32, i32
  }
  func.func @transform_3(%arg0: i32) -> (i32, i32) {
    %c0_i32 = arith.constant 0 : i32
    %c0_i32_0 = arith.constant 0 : i32
    %c0_i32_1 = arith.constant 0 : i32
    return %c0_i32, %c0_i32_0 : i32, i32
  }
  func.func @transform_4(%arg0: i32) -> (i32, i32) {
    %c0_i32 = arith.constant 0 : i32
    %c0_i32_0 = arith.constant 0 : i32
    return %arg0, %c0_i32 : i32, i32
  }
}

</mosaic_0001>

<llo_original>
// kernel: tpu_custom_call.1
$region0: #{tpu_custom_call.1}
  #allocation0 [shape = 'u32[]', space=smem, size = 0x4, offset = 0x4, fixed_abs, tag = 'smem constant byte address 0x4 - core index']
  #allocation1 [shape = 'u32[144,128]{1,0:T(1,128)}', space=vmem, size = 0x12000, scoped, tag = 'internal scratch']
  %s0 = inlined_call_operand.vmem [shape: f32[8,6], index: 0, kind: input, shape index: {}]
  %s1 = inlined_call_operand.vmem [shape: s32[8,1], index: 1, kind: input, shape index: {}]
  %s2 = inlined_call_operand.hbm [shape: f32[6,6], index: 2, kind: input, shape index: {}]
  %s3 = inlined_call_operand.vmem [shape: f32[1,6], index: 3, kind: input, shape index: {}]
  %s4 = inlined_call_operand.hbm [shape: f32[1,1], index: 4, kind: output, shape index: {}]
  %s5 = sld [smem:[#allocation0]]
  $region30: #{tpu_custom_call.1} parent=0
    _
  %s7 = ssub.s32 1, %s5
  %s8 = scalar_select 0, %s7, %s5
  $region1: #{tpu_custom_call.1} parent=0
    #allocation2 [shape = 'u8[4096]{0}', space=vmem, size = 0x1000, scoped, tag = 'input window, operand 2, single buffered']
    #allocation3 [shape = 's32[1]{0}', space=sflag, size = 0x4, scoped, tag = 'scoped memory for tpu_custom_call.1']
    #allocation4 [shape = 's32[1]{0}', space=sflag, size = 0x4, scoped, tag = 'scoped memory for tpu_custom_call.1']
    #allocation5 [shape = 'u8[512]{0}', space=smem, size = 0x200, scoped, tag = 'output window, operand 0, single buffered']
    %9 = vsyncpa [#allocation3], 0
    %10 = vsyncpa [#allocation4], 0
    // Predicated region
    $region2: #{tpu_custom_call.1} parent=1 // pred_check
      _
    $region3: #{tpu_custom_call.1} parent=1 // pred_check_branch
      %12 = sbr.rel (0) target = $region5
    $region4: #{tpu_custom_call.1} parent=1 // pred_region
      _
    $region5: #{tpu_custom_call.1} parent=1 // pred_fallthru
      _
    // Predicated region
    $region6: #{tpu_custom_call.1} parent=1 // pred_check
      _
    $region7: #{tpu_custom_call.1} parent=1 // pred_check_branch
      %14 = sbr.rel (0) target = $region9
    $region8: #{tpu_custom_call.1} parent=1 // pred_region
      _
    $region9: #{tpu_custom_call.1} parent=1 // pred_fallthru
      _
    // Predicated region
    $region10: #{tpu_custom_call.1} parent=1 // pred_check
      _
    $region11: #{tpu_custom_call.1} parent=1 // pred_check_branch
      %16 = sbr.rel (0) target = $region13
    $region12: #{tpu_custom_call.1} parent=1 // pred_region
      %s18 = ssub.s32 128, 128
      %19 = vsyncadd [#allocation3], %s18
      %s21 = sshll.u32 [#allocation2], 4
      %s22 = int_to_ptr.vmem [resolvable:$true] %s21
      %24 = dma.hbm_to_vmem [thread:$0]  %s2, 128, %s22, [#allocation3]
    $region13: #{tpu_custom_call.1} parent=1 // pred_fallthru
      _
    // Predicated region
    $region14: #{tpu_custom_call.1} parent=1 // pred_check
      _
    $region15: #{tpu_custom_call.1} parent=1 // pred_check_branch
      %26 = sbr.rel (0) target = $region17
    $region16: #{tpu_custom_call.1} parent=1 // pred_region
      _
    $region17: #{tpu_custom_call.1} parent=1 // pred_fallthru
      _
    // Predicated region
    $region18: #{tpu_custom_call.1} parent=1 // pred_check
      _
    $region19: #{tpu_custom_call.1} parent=1 // pred_check_branch
      %28 = sbr.rel (0) target = $region21
    $region20: #{tpu_custom_call.1} parent=1 // pred_region
      %29 = dma.done [#allocation3], 128
    $region21: #{tpu_custom_call.1} parent=1 // pred_fallthru
      _
    %v30 = vld [vmem:[%s0] sm:$0xff]
    %vm31 = vcmask 48128
    %v32 = vsel %vm31, %v30, -inf
    %33 = vmax.xlane.f32.xlu0 %v32
    %v34 = vpop.xlane.xlu0 %33
    %v35 = vsub.f32 %v30, %v34
    %v36 = vmul.f32 %v35, 1.442695
    %v37 = vpow.pop %v36
    %v38 = vsel %vm31, %v37, 0.0
    %39 = vadd.xlane.f32.xlu0 %v38
    %v40 = vpop.xlane.xlu0 %39
    %v41 = vlog2.pop %v40
    %v42 = vmul.f32 %v41, 0.6931472
    %v43 = vsub.f32 %v35, %v42
    %v44 = vlaneseq
    %v45 = vand.u32 %v44, 127
    %v46 = vld [vmem:[%s1] sm:$0xff]
    %47 = vset.pattern.permute.xlu0 0
    %48 = vperm.xlu0 %47, %v46
    %v49 = vpop.permute.xlu0 %48
    %vm50 = vcmp.eq.s32.totalorder %v45, %v49
    %v51 = vsel %vm50, 1, 0
    %v52 = vcvt.s32.f32 %v51
    %v53 = vld [vmem:[#allocation2] sm:$0x3f]
    %v54 = vld [vmem:[%s3] sm:$0x1]
    %v56 = vlaneseq
    %v57 = vshrl.u32 %v56, 7
    %v58 = vsub.s32 0, %v57
    %v59 = vrot.slane %v54, %v58
    %v61 = vmul.f32 %v52, %v59
    %v62 = vsel %vm31, %v61, 0.0
    %63 = vadd.xlane.f32.xlu0 %v62
    %v64 = vpop.xlane.xlu0 %63
    %v65 = vrot.slane %v64, 4
    %v66 = vadd.f32 %v64, %v65
    %v67 = vrot.slane %v66, 2
    %v68 = vadd.f32 %v66, %v67
    %v69 = vrot.slane %v68, 1
    %v70 = vadd.f32 %v68, %v69
    %s71 = vtos %v70
    %v73 = vsel %vm31, %v52, 0
    %vm75 = vcmask 1045504
    %v77 = vsel %vm75, %v53, 0
    %79 = vmatprep.subr.mxu0 0.0
    %80 = vmatpush1.msra.mxu0 0.0
    %81 = vmatprep.subr.mxu0 0.0
    %82 = vmatpush1.msra.mxu0 0.0
    %83 = vmatprep.subr.mxu0 0.0
    %84 = vmatpush1.msra.mxu0 0.0
    %85 = vmatprep.subr.mxu0 0.0
    %86 = vmatpush1.msra.mxu0 0.0
    %87 = vmatprep.subr.mxu0 0.0
    %88 = vmatpush1.msra.mxu0 0.0
    %89 = vmatprep.subr.mxu0 0.0
    %90 = vmatpush1.msra.mxu0 0.0
    %91 = vmatprep.subr.mxu0 0.0
    %92 = vmatpush1.msra.mxu0 0.0
    %93 = vmatprep.subr.mxu0 0.0
    %94 = vmatpush1.msra.mxu0 0.0
    %95 = vmatprep.subr.mxu0 0.0
    %96 = vmatpush1.msra.mxu0 0.0
    %97 = vmatprep.subr.mxu0 0.0
    %98 = vmatpush1.msra.mxu0 0.0
    %99 = vmatprep.subr.mxu0 0.0
    %100 = vmatpush1.msra.mxu0 0.0
    %101 = vmatprep.subr.mxu0 0.0
    %102 = vmatpush1.msra.mxu0 0.0
    %103 = vmatprep.subr.mxu0 0.0
    %104 = vmatpush1.msra.mxu0 0.0
    %105 = vmatprep.subr.mxu0 0.0
    %106 = vmatpush1.msra.mxu0 0.0
    %107 = vmatprep.subr.mxu0 0.0
    %108 = vmatpush1.msra.mxu0 0.0
    %109 = vmatprep.subr.mxu0 0.0
    %110 = vmatpush1.msra.mxu0 %v77
    %111 = vmatprep.subr.mxu0 0.0
    %112 = vmatpush2.msra.mxu0 0.0
    %113 = vmatprep.subr.mxu0 0.0
    %114 = vmatpush2.msra.mxu0 0.0
    %115 = vmatprep.subr.mxu0 0.0
    %116 = vmatpush2.msra.mxu0 0.0
    %117 = vmatprep.subr.mxu0 0.0
    %118 = vmatpush2.msra.mxu0 0.0
    %119 = vmatprep.subr.mxu0 0.0
    %120 = vmatpush2.msra.mxu0 0.0
    %121 = vmatprep.subr.mxu0 0.0
    %122 = vmatpush2.msra.mxu0 0.0
    %123 = vmatprep.subr.mxu0 0.0
    %124 = vmatpush2.msra.mxu0 0.0
    %125 = vmatprep.subr.mxu0 0.0
    %126 = vmatpush2.msra.mxu0 0.0
    %127 = vmatprep.subr.mxu0 0.0
    %128 = vmatpush2.msra.mxu0 0.0
    %129 = vmatprep.subr.mxu0 0.0
    %130 = vmatpush2.msra.mxu0 0.0
    %131 = vmatprep.subr.mxu0 0.0
    %132 = vmatpush2.msra.mxu0 0.0
    %133 = vmatprep.subr.mxu0 0.0
    %134 = vmatpush2.msra.mxu0 0.0
    %135 = vmatprep.subr.mxu0 0.0
    %136 = vmatpush2.msra.mxu0 0.0
    %137 = vmatprep.subr.mxu0 0.0
    %138 = vmatpush2.msra.mxu0 0.0
    %139 = vmatprep.subr.mxu0 0.0
    %140 = vmatpush2.msra.mxu0 0.0
    %141 = vmatprep.subr.mxu0 0.0
    %142 = vmatpush2.msra.mxu0 0.0
    %143 = vmatprep.mubr.f32.mxu0 0.0
    %144 = vmatmul.mubr.f32.gmra.mxu0 %v73
    %v145 = vpop.f32.mrf.mxu0
    %v146 = vadd.f32 %v52, %v145
    %v147 = vpop.f32.mrf.mxu0
    %148 = vdwg.mxu0
    %v149 = vmul.f32 %v146, %v43
    %v150 = vsel %vm31, %v149, 0.0
    %151 = vadd.xlane.f32.xlu0 %v150
    %v152 = vpop.xlane.xlu0 %151
    %v153 = vrot.slane %v152, 4
    %v154 = vadd.f32 %v152, %v153
    %v155 = vrot.slane %v154, 2
    %v156 = vadd.f32 %v154, %v155
    %v157 = vrot.slane %v156, 1
    %v158 = vadd.f32 %v156, %v157
    %s159 = vtos %v158
    %s160 = ssub.f32 %s71, %s159
    %s161 = scalar_lea.smem [#allocation5], 0
    %162 = sst [smem:[%s161]] %s160
    // Predicated region
    $region22: #{tpu_custom_call.1} parent=1 // pred_check
      _
    $region23: #{tpu_custom_call.1} parent=1 // pred_check_branch
      %164 = sbr.rel (0) target = $region25
    $region24: #{tpu_custom_call.1} parent=1 // pred_region
      %s166 = ssub.s32 16, 16
      %167 = vsyncadd [#allocation4], %s166
      %170 = dma.smem_to_hbm [#allocation5], 16, %s4, [#allocation4]
    $region25: #{tpu_custom_call.1} parent=1 // pred_fallthru
      _
    // Predicated region
    $region26: #{tpu_custom_call.1} parent=1 // pred_check
      _
    $region27: #{tpu_custom_call.1} parent=1 // pred_check_branch
      %172 = sbr.rel (0) target = $region29
    $region28: #{tpu_custom_call.1} parent=1 // pred_region
      %173 = dma.done [#allocation4], 16
    $region29: #{tpu_custom_call.1} parent=1 // pred_fallthru
      _
    %174 = sfence
    %175 = vsyncpa [#allocation3], 1
    %176 = vsyncpa [#allocation4], 1

</llo_original>
